<compile_context>
chip_gen: v6e
topology: v6e:2x2x1
jax: 0.10.0
libtpu: 0.0.40
codegen_flags: <defaults>
</compile_context>

<pallas_src>
import functools

import jax
import jax.numpy as jnp
from jax.experimental import pallas as pl
from jax.experimental.pallas import tpu as pltpu


def _round_up(x, m):
    return (x + m - 1) // m * m


def _mlp_kernel(x_ref, w1_ref, b1_ref, w2_ref, b2_ref, o_ref, *, compute_dtype):
    # x:  [bb, in_dim]           w1: [in_dim, n_hidden]   b1: [1, n_hidden] (f32)
    # h:  [bb, n_hidden] (f32)   w2: [n_hidden, out_dim]  b2: [1, out_dim]  (f32)
    x = x_ref[...].astype(compute_dtype)
    h = jnp.dot(x, w1_ref[...], preferred_element_type=jnp.float32)
    h = jnp.maximum(h + b1_ref[...], 0.0)                 # bias + ReLU on f32 accumulator (VPU)
    out = jnp.dot(h.astype(compute_dtype), w2_ref[...],
                  preferred_element_type=jnp.float32) + b2_ref[...]
    o_ref[...] = out.astype(o_ref.dtype)                  # direct (bb, out_dim) store (no slice pass)


def make_mnet_forward(w1, b1, w2, b2, *, block_b=1024,
                      compute_dtype=jnp.float32, xla_fallback_batch=0):
    """Build a jitted forward pass for MNet.

    Weight transposition ([out, in] -> [in, out]) and dtype casting happen ONCE here.
    `compute_dtype=jnp.bfloat16` enables bf16 MXU inputs (f32 accumulation kept).
    `xla_fallback_batch`: batches <= this skip the Pallas kernel entirely (launch
    overhead dominates at tiny B); default 0 so the kernel always runs here.
    """
    assert block_b % 16 == 0, "block_b must be a multiple of 16 (sublane packing)"
    n_hidden, in_dim = w1.shape
    out_dim = w2.shape[0]

    # One-time parameter prep (hoisted out of the per-call path).
    w1_p = jnp.asarray(w1, jnp.float32).T.astype(compute_dtype)   # (in_dim, n_hidden)
    w2_p = jnp.asarray(w2, jnp.float32).T.astype(compute_dtype)   # (n_hidden, out_dim)
    b1_p = jnp.asarray(b1, jnp.float32).reshape(1, n_hidden)      # biases stay f32
    b2_p = jnp.asarray(b2, jnp.float32).reshape(1, out_dim)

    kernel = functools.partial(_mlp_kernel, compute_dtype=compute_dtype)

    @jax.jit
    def forward(x):
        B = x.shape[0]
        assert x.shape == (B, in_dim)

        if B <= xla_fallback_batch:
            # Tiny-batch fallback: one fused XLA expression beats kernel launch cost.
            h = jnp.maximum(x.astype(jnp.float32) @ w1_p.astype(jnp.float32) + b1_p, 0.0)
            return h @ w2_p.astype(jnp.float32) + b2_p

        # Sublane granularity for the batch tile: 16-bit x packs 2 rows / sublane.
        gran = 16 if jnp.dtype(x.dtype).itemsize == 2 else 8
        if B <= gran:
            bb = B                                    # single block == full batch dim (legal)
        else:
            # Aim for >= 2 grid steps (keeps both v7x TensorCores busy), cap at block_b.
            bb = min(block_b, _round_up((B + 1) // 2, gran))

        grid = (pl.cdiv(B, bb),)                      # masked tail tile; no wrapper padding

        return pl.pallas_call(
            kernel,
            out_shape=jax.ShapeDtypeStruct((B, out_dim), jnp.float32),
            grid=grid,
            in_specs=[
                pl.BlockSpec((bb, in_dim), lambda i: (i, 0)),        # x streams over batch
                pl.BlockSpec((in_dim, n_hidden), lambda i: (0, 0)),  # weights stay VMEM-resident
                pl.BlockSpec((1, n_hidden), lambda i: (0, 0)),
                pl.BlockSpec((n_hidden, out_dim), lambda i: (0, 0)),
                pl.BlockSpec((1, out_dim), lambda i: (0, 0)),
            ],
            out_specs=pl.BlockSpec((bb, out_dim), lambda i: (i, 0)),
            compiler_params=pltpu.CompilerParams(
                dimension_semantics=("parallel",)),   # batch tiles shard across TCs (v7x)
        )(x, w1_p, b1_p, w2_p, b2_p)

    return forward


def _init_linear(key, out_features, in_features):
    """Deterministic init matching nn.Linear's uniform(-1/sqrt(fan_in), 1/sqrt(fan_in))."""
    kw, kb = jax.random.split(key)
    bound = 1.0 / jnp.sqrt(jnp.float32(in_features))
    w = jax.random.uniform(kw, (out_features, in_features), jnp.float32,
                           minval=-bound, maxval=bound)
    b = jax.random.uniform(kb, (out_features,), jnp.float32,
                           minval=-bound, maxval=bound)
    return w, b


if __name__ == "__main__":
    # Small shapes implied by the module: x is [batch, in_dim].
    batch, in_dim, n_hidden, out_dim = 8, 16, 32, 10

    key = jax.random.PRNGKey(0)
    kx, kx2, k1, k2 = jax.random.split(key, 4)

    x = jax.random.normal(kx, (batch, in_dim), jnp.float32)
    w1, b1 = _init_linear(k1, n_hidden, in_dim)
    w2, b2 = _init_linear(k2, out_dim, n_hidden)

    def ref_fn(xv):
        return jnp.maximum(xv @ w1.T + b1, 0.0) @ w2.T + b2

    # f32 path, tiny batch (single tile).
    forward = make_mnet_forward(w1, b1, w2, b2)
    out = forward(x)
    jax.block_until_ready(out)
    assert out.shape == (batch, out_dim)
    assert jnp.allclose(out, ref_fn(x), atol=1e-5, rtol=1e-5)

    # f32 path, larger odd batch: 2-step "parallel" grid + masked tail tile (no padding ops).
    x_big = jax.random.normal(kx2, (1000, in_dim), jnp.float32)
    out_big = forward(x_big)
    jax.block_until_ready(out_big)
    assert out_big.shape == (1000, out_dim)
    assert jnp.allclose(out_big, ref_fn(x_big), atol=1e-5, rtol=1e-5)

    # bf16 streaming path: caller feeds bf16 x (half the HBM read traffic), f32 accumulation.
    forward_bf16 = make_mnet_forward(w1, b1, w2, b2, compute_dtype=jnp.bfloat16)
    out_bf16 = forward_bf16(x_big.astype(jnp.bfloat16))
    jax.block_until_ready(out_bf16)
    assert out_bf16.shape == (1000, out_dim)
    assert jnp.allclose(out_bf16, ref_fn(x_big), atol=1e-1, rtol=0)

    print("KERNEL_OK")
</pallas_src>

<mosaic_0001>
module attributes {stable_mosaic.version = 11 : i64} {
  func.func @_mlp_kernel(%arg0: i32, %arg1: memref<8x16xf32, #tpu.memory_space<vmem>>, %arg2: memref<16x32xf32, #tpu.memory_space<vmem>>, %arg3: memref<1x32xf32, #tpu.memory_space<vmem>>, %arg4: memref<32x10xf32, #tpu.memory_space<vmem>>, %arg5: memref<1x10xf32, #tpu.memory_space<vmem>>, %arg6: memref<8x10xf32, #tpu.memory_space<vmem>>) attributes {dimension_semantics = [#tpu.dimension_semantics<parallel>], iteration_bounds = array<i64: 1>, scalar_prefetch = 0 : i64, scratch_operands = 0 : i64, tpu.core_type = #tpu.core_type<tc>, window_params = [{transform_indices = @transform_0, window_bounds = array<i64: 8, 16>}, {pipeline_mode = #tpu.pipeline_mode<synchronous>, transform_indices = @transform_1, window_bounds = array<i64: 16, 32>}, {pipeline_mode = #tpu.pipeline_mode<synchronous>, transform_indices = @transform_2, window_bounds = array<i64: 1, 32>}, {pipeline_mode = #tpu.pipeline_mode<synchronous>, transform_indices = @transform_3, window_bounds = array<i64: 32, 10>}, {pipeline_mode = #tpu.pipeline_mode<synchronous>, transform_indices = @transform_4, window_bounds = array<i64: 1, 10>}, {transform_indices = @transform_5, window_bounds = array<i64: 8, 10>}]} {
    %c0 = arith.constant 0 : index
    %c0_0 = arith.constant 0 : index
    %0 = vector.load %arg1[%c0, %c0_0] : memref<8x16xf32, #tpu.memory_space<vmem>>, vector<8x16xf32>
    %c0_1 = arith.constant 0 : index
    %c0_2 = arith.constant 0 : index
    %1 = vector.load %arg2[%c0_1, %c0_2] : memref<16x32xf32, #tpu.memory_space<vmem>>, vector<16x32xf32>
    %cst = arith.constant dense<0.000000e+00> : vector<8x32xf32>
    %2 = tpu.matmul %0, %1, %cst {dimension_numbers = #tpu.dot_dimension_numbers<[1], [0], [0], [1], [0, 0, 1, 1], [], []>} : vector<8x16xf32>, vector<16x32xf32>, vector<8x32xf32> -> vector<8x32xf32>
    %c0_3 = arith.constant 0 : index
    %c0_4 = arith.constant 0 : index
    %3 = vector.load %arg3[%c0_3, %c0_4] : memref<1x32xf32, #tpu.memory_space<vmem>>, vector<1x32xf32>
    %4 = vector.broadcast %3 : vector<1x32xf32> to vector<8x32xf32>
    %5 = arith.addf %2, %4 : vector<8x32xf32>
    %cst_5 = arith.constant 0.000000e+00 : f32
    %6 = vector.broadcast %cst_5 : f32 to vector<8x32xf32>
    %7 = arith.maximumf %5, %6 : vector<8x32xf32>
    %c0_6 = arith.constant 0 : index
    %c0_7 = arith.constant 0 : index
    %8 = vector.load %arg4[%c0_6, %c0_7] : memref<32x10xf32, #tpu.memory_space<vmem>>, vector<32x10xf32>
    %cst_8 = arith.constant dense<0.000000e+00> : vector<8x10xf32>
    %9 = tpu.matmul %7, %8, %cst_8 {dimension_numbers = #tpu.dot_dimension_numbers<[1], [0], [0], [1], [0, 0, 1, 1], [], []>} : vector<8x32xf32>, vector<32x10xf32>, vector<8x10xf32> -> vector<8x10xf32>
    %c0_9 = arith.constant 0 : index
    %c0_10 = arith.constant 0 : index
    %10 = vector.load %arg5[%c0_9, %c0_10] : memref<1x10xf32, #tpu.memory_space<vmem>>, vector<1x10xf32>
    %11 = vector.broadcast %10 : vector<1x10xf32> to vector<8x10xf32>
    %12 = arith.addf %9, %11 : vector<8x10xf32>
    %c0_11 = arith.constant 0 : index
    %c0_12 = arith.constant 0 : index
    %13 = vector.load %arg6[%c0_11, %c0_12] : memref<8x10xf32, #tpu.memory_space<vmem>>, vector<8x10xf32>
    tpu.vector_store %arg6[%c0_11, %c0_12], %12 {strides = array<i32>} : memref<8x10xf32, #tpu.memory_space<vmem>>, vector<8x10xf32>,
    return
  }
  func.func @transform_0(%arg0: i32) -> (i32, i32) {
    %c0_i32 = arith.constant 0 : i32
    %c0_i32_0 = arith.constant 0 : i32
    return %arg0, %c0_i32 : i32, i32
  }
  func.func @transform_1(%arg0: i32) -> (i32, i32) {
    %c0_i32 = arith.constant 0 : i32
    %c0_i32_0 = arith.constant 0 : i32
    %c0_i32_1 = arith.constant 0 : i32
    return %c0_i32, %c0_i32_0 : i32, i32
  }
  func.func @transform_2(%arg0: i32) -> (i32, i32) {
    %c0_i32 = arith.constant 0 : i32
    %c0_i32_0 = arith.constant 0 : i32
    %c0_i32_1 = arith.constant 0 : i32
    return %c0_i32, %c0_i32_0 : i32, i32
  }
  func.func @transform_3(%arg0: i32) -> (i32, i32) {
    %c0_i32 = arith.constant 0 : i32
    %c0_i32_0 = arith.constant 0 : i32
    %c0_i32_1 = arith.constant 0 : i32
    return %c0_i32, %c0_i32_0 : i32, i32
  }
  func.func @transform_4(%arg0: i32) -> (i32, i32) {
    %c0_i32 = arith.constant 0 : i32
    %c0_i32_0 = arith.constant 0 : i32
    %c0_i32_1 = arith.constant 0 : i32
    return %c0_i32, %c0_i32_0 : i32, i32
  }
  func.func @transform_5(%arg0: i32) -> (i32, i32) {
    %c0_i32 = arith.constant 0 : i32
    %c0_i32_0 = arith.constant 0 : i32
    return %arg0, %c0_i32 : i32, i32
  }
}

</mosaic_0001>

<llo_original>
// kernel: forward.1
$region0: #{forward.1}
  #allocation0 [shape = 'u32[]', space=smem, size = 0x4, offset = 0x4, fixed_abs, tag = 'smem constant byte address 0x4 - core index']
  #allocation1 [shape = 'u32[144,128]{1,0:T(1,128)}', space=vmem, size = 0x12000, scoped, tag = 'internal scratch']
  %s0 = inlined_call_operand.hbm [shape: f32[8,16], index: 0, kind: input, shape index: {}]
  %s1 = inlined_call_operand.hbm [shape: f32[16,32], index: 1, kind: input, shape index: {}]
  %s2 = inlined_call_operand.vmem [shape: f32[1,32], index: 2, kind: input, shape index: {}]
  %s3 = inlined_call_operand.hbm [shape: f32[32,10], index: 3, kind: input, shape index: {}]
  %s4 = inlined_call_operand.vmem [shape: f32[1,10], index: 4, kind: input, shape index: {}]
  %s5 = inlined_call_operand.hbm [shape: f32[8,10], index: 5, kind: output, shape index: {}]
  %s6 = sld [smem:[#allocation0]]
  $region42: #{forward.1} parent=0
    _
  %s8 = ssub.s32 1, %s6
  %s9 = scalar_select 0, %s8, %s6
  $region1: #{forward.1} parent=0
    #allocation2 [shape = 'u8[4096]{0}', space=vmem, size = 0x1000, scoped, tag = 'input window, operand 0, single buffered']
    #allocation3 [shape = 's32[1]{0}', space=sflag, size = 0x4, scoped, tag = 'scoped memory for forward.1']
    #allocation4 [shape = 's32[1]{0}', space=sflag, size = 0x4, scoped, tag = 'scoped memory for forward.1']
    #allocation5 [shape = 'u8[8192]{0}', space=vmem, size = 0x2000, scoped, tag = 'input window, operand 1, single buffered']
    #allocation6 [shape = 's32[1]{0}', space=sflag, size = 0x4, scoped, tag = 'scoped memory for forward.1']
    #allocation7 [shape = 'u8[16384]{0}', space=vmem, size = 0x4000, scoped, tag = 'input window, operand 3, single buffered']
    #allocation8 [shape = 'u8[4096]{0}', space=vmem, size = 0x1000, scoped, tag = 'output window, operand 0, single buffered']
    %10 = vsyncpa [#allocation3], 0
    %11 = vsyncpa [#allocation6], 0
    %12 = vsyncpa [#allocation4], 0
    // Predicated region
    $region2: #{forward.1} parent=1 // pred_check
      _
    $region3: #{forward.1} parent=1 // pred_check_branch
      %14 = sbr.rel (0) target = $region5
    $region4: #{forward.1} parent=1 // pred_region
      %s16 = ssub.s32 128, 128
      %17 = vsyncadd [#allocation3], %s16
      %s19 = sshll.u32 [#allocation2], 4
      %s20 = int_to_ptr.vmem [resolvable:$true] %s19
      %22 = dma.hbm_to_vmem [thread:$0]  %s0, 128, %s20, [#allocation3]
    $region5: #{forward.1} parent=1 // pred_fallthru
      _
    // Predicated region
    $region6: #{forward.1} parent=1 // pred_check
      _
    $region7: #{forward.1} parent=1 // pred_check_branch
      %24 = sbr.rel (0) target = $region9
    $region8: #{forward.1} parent=1 // pred_region
      %s26 = ssub.s32 256, 256
      %27 = vsyncadd [#allocation6], %s26
      %s28 = sshll.u32 [#allocation5], 4
      %s29 = int_to_ptr.vmem [resolvable:$true] %s28
      %34 = dma.hbm_to_vmem [thread:$0]  %s1, 256, %s29, [#allocation6], 128, 128, 8
    $region9: #{forward.1} parent=1 // pred_fallthru
      _
    // Predicated region
    $region10: #{forward.1} parent=1 // pred_check
      _
    $region11: #{forward.1} parent=1 // pred_check_branch
      %36 = sbr.rel (0) target = $region13
    $region12: #{forward.1} parent=1 // pred_region
      _
    $region13: #{forward.1} parent=1 // pred_fallthru
      _
    // Predicated region
    $region14: #{forward.1} parent=1 // pred_check
      _
    $region15: #{forward.1} parent=1 // pred_check_branch
      %38 = sbr.rel (0) target = $region17
    $region16: #{forward.1} parent=1 // pred_region
      %s40 = ssub.s32 512, 512
      %41 = vsyncadd [#allocation6], %s40
      %s42 = sshll.u32 [#allocation7], 4
      %s43 = int_to_ptr.vmem [resolvable:$true] %s42
      %48 = dma.hbm_to_vmem [thread:$0]  %s3, 512, %s43, [#allocation6], 128, 128, 8
    $region17: #{forward.1} parent=1 // pred_fallthru
      _
    // Predicated region
    $region18: #{forward.1} parent=1 // pred_check
      _
    $region19: #{forward.1} parent=1 // pred_check_branch
      %50 = sbr.rel (0) target = $region21
    $region20: #{forward.1} parent=1 // pred_region
      _
    $region21: #{forward.1} parent=1 // pred_fallthru
      _
    // Predicated region
    $region22: #{forward.1} parent=1 // pred_check
      _
    $region23: #{forward.1} parent=1 // pred_check_branch
      %52 = sbr.rel (0) target = $region25
    $region24: #{forward.1} parent=1 // pred_region
      %53 = dma.done [#allocation3], 128
    $region25: #{forward.1} parent=1 // pred_fallthru
      _
    // Predicated region
    $region26: #{forward.1} parent=1 // pred_check
      _
    $region27: #{forward.1} parent=1 // pred_check_branch
      %55 = sbr.rel (0) target = $region29
    $region28: #{forward.1} parent=1 // pred_region
      %56 = dma.done [#allocation6], 256
    $region29: #{forward.1} parent=1 // pred_fallthru
      _
    // Predicated region
    $region30: #{forward.1} parent=1 // pred_check
      _
    $region31: #{forward.1} parent=1 // pred_check_branch
      %58 = sbr.rel (0) target = $region33
    $region32: #{forward.1} parent=1 // pred_region
      %59 = dma.done [#allocation6], 512
    $region33: #{forward.1} parent=1 // pred_fallthru
      _
    %v60 = vld [vmem:[#allocation2] sm:$0xff]
    %v61 = vld [vmem:[#allocation5] sm:$0xff]
    %v62 = vld [vmem:[#allocation5 + $0x8] sm:$0xff]
    %v63 = vld [vmem:[%s2] sm:$0x1]
    %v65 = vlaneseq
    %v66 = vshrl.u32 %v65, 7
    %v67 = vsub.s32 0, %v66
    %v68 = vrot.slane %v63, %v67
    %vm70 = vcmask 130048
    %v72 = vsel %vm70, %v60, 0
    %74 = vmatprep.subr.mxu0 0.0
    %75 = vmatpush1.msra.mxu0 0.0
    %76 = vmatprep.subr.mxu0 0.0
    %77 = vmatpush1.msra.mxu0 0.0
    %78 = vmatprep.subr.mxu0 0.0
    %79 = vmatpush1.msra.mxu0 0.0
    %80 = vmatprep.subr.mxu0 0.0
    %81 = vmatpush1.msra.mxu0 0.0
    %82 = vmatprep.subr.mxu0 0.0
    %83 = vmatpush1.msra.mxu0 0.0
    %84 = vmatprep.subr.mxu0 0.0
    %85 = vmatpush1.msra.mxu0 0.0
    %86 = vmatprep.subr.mxu0 0.0
    %87 = vmatpush1.msra.mxu0 0.0
    %88 = vmatprep.subr.mxu0 0.0
    %89 = vmatpush1.msra.mxu0 0.0
    %90 = vmatprep.subr.mxu0 0.0
    %91 = vmatpush1.msra.mxu0 0.0
    %92 = vmatprep.subr.mxu0 0.0
    %93 = vmatpush1.msra.mxu0 0.0
    %94 = vmatprep.subr.mxu0 0.0
    %95 = vmatpush1.msra.mxu0 0.0
    %96 = vmatprep.subr.mxu0 0.0
    %97 = vmatpush1.msra.mxu0 0.0
    %98 = vmatprep.subr.mxu0 0.0
    %99 = vmatpush1.msra.mxu0 0.0
    %100 = vmatprep.subr.mxu0 0.0
    %101 = vmatpush1.msra.mxu0 0.0
    %102 = vmatprep.subr.mxu0 0.0
    %103 = vmatpush1.msra.mxu0 %v62
    %104 = vmatprep.subr.mxu0 0.0
    %105 = vmatpush1.msra.mxu0 %v61
    %106 = vmatprep.subr.mxu0 0.0
    %107 = vmatpush2.msra.mxu0 0.0
    %108 = vmatprep.subr.mxu0 0.0
    %109 = vmatpush2.msra.mxu0 0.0
    %110 = vmatprep.subr.mxu0 0.0
    %111 = vmatpush2.msra.mxu0 0.0
    %112 = vmatprep.subr.mxu0 0.0
    %113 = vmatpush2.msra.mxu0 0.0
    %114 = vmatprep.subr.mxu0 0.0
    %115 = vmatpush2.msra.mxu0 0.0
    %116 = vmatprep.subr.mxu0 0.0
    %117 = vmatpush2.msra.mxu0 0.0
    %118 = vmatprep.subr.mxu0 0.0
    %119 = vmatpush2.msra.mxu0 0.0
    %120 = vmatprep.subr.mxu0 0.0
    %121 = vmatpush2.msra.mxu0 0.0
    %122 = vmatprep.subr.mxu0 0.0
    %123 = vmatpush2.msra.mxu0 0.0
    %124 = vmatprep.subr.mxu0 0.0
    %125 = vmatpush2.msra.mxu0 0.0
    %126 = vmatprep.subr.mxu0 0.0
    %127 = vmatpush2.msra.mxu0 0.0
    %128 = vmatprep.subr.mxu0 0.0
    %129 = vmatpush2.msra.mxu0 0.0
    %130 = vmatprep.subr.mxu0 0.0
    %131 = vmatpush2.msra.mxu0 0.0
    %132 = vmatprep.subr.mxu0 0.0
    %133 = vmatpush2.msra.mxu0 0.0
    %134 = vmatprep.subr.mxu0 0.0
    %135 = vmatpush2.msra.mxu0 0.0
    %136 = vmatprep.subr.mxu0 0.0
    %137 = vmatpush2.msra.mxu0 0.0
    %138 = vmatprep.mubr.f32.mxu0 0.0
    %139 = vmatmul.mubr.f32.gmra.mxu0 %v72
    %v140 = vpop.f32.mrf.mxu0
    %v141 = vadd.f32 %v68, %v140
    %v142 = vpop.f32.mrf.mxu0
    %143 = vdwg.mxu0
    %v144 = vmax.f32 %v141, 0.0
    %v145 = vld [vmem:[#allocation7] sm:$0xff]
    %v146 = vld [vmem:[#allocation7 + $0x8] sm:$0xff]
    %v147 = vld [vmem:[#allocation7 + $0x10] sm:$0xff]
    %v148 = vld [vmem:[#allocation7 + $0x18] sm:$0xff]
    %v149 = vld [vmem:[%s4] sm:$0x1]
    %v151 = vlaneseq
    %v152 = vshrl.u32 %v151, 7
    %v153 = vsub.s32 0, %v152
    %v154 = vrot.slane %v149, %v153
    %vm156 = vcmask 261120
    %v158 = vsel %vm156, %v144, 0
    %160 = vmatprep.subr.mxu0 0.0
    %161 = vmatpush1.msra.mxu0 0.0
    %162 = vmatprep.subr.mxu0 0.0
    %163 = vmatpush1.msra.mxu0 0.0
    %164 = vmatprep.subr.mxu0 0.0
    %165 = vmatpush1.msra.mxu0 0.0
    %166 = vmatprep.subr.mxu0 0.0
    %167 = vmatpush1.msra.mxu0 0.0
    %168 = vmatprep.subr.mxu0 0.0
    %169 = vmatpush1.msra.mxu0 0.0
    %170 = vmatprep.subr.mxu0 0.0
    %171 = vmatpush1.msra.mxu0 0.0
    %172 = vmatprep.subr.mxu0 0.0
    %173 = vmatpush1.msra.mxu0 0.0
    %174 = vmatprep.subr.mxu0 0.0
    %175 = vmatpush1.msra.mxu0 0.0
    %176 = vmatprep.subr.mxu0 0.0
    %177 = vmatpush1.msra.mxu0 0.0
    %178 = vmatprep.subr.mxu0 0.0
    %179 = vmatpush1.msra.mxu0 0.0
    %180 = vmatprep.subr.mxu0 0.0
    %181 = vmatpush1.msra.mxu0 0.0
    %182 = vmatprep.subr.mxu0 0.0
    %183 = vmatpush1.msra.mxu0 0.0
    %184 = vmatprep.subr.mxu0 0.0
    %185 = vmatpush1.msra.mxu0 %v148
    %186 = vmatprep.subr.mxu0 0.0
    %187 = vmatpush1.msra.mxu0 %v147
    %188 = vmatprep.subr.mxu0 0.0
    %189 = vmatpush1.msra.mxu0 %v146
    %190 = vmatprep.subr.mxu0 0.0
    %191 = vmatpush1.msra.mxu0 %v145
    %192 = vmatprep.subr.mxu0 0.0
    %193 = vmatpush2.msra.mxu0 0.0
    %194 = vmatprep.subr.mxu0 0.0
    %195 = vmatpush2.msra.mxu0 0.0
    %196 = vmatprep.subr.mxu0 0.0
    %197 = vmatpush2.msra.mxu0 0.0
    %198 = vmatprep.subr.mxu0 0.0
    %199 = vmatpush2.msra.mxu0 0.0
    %200 = vmatprep.subr.mxu0 0.0
    %201 = vmatpush2.msra.mxu0 0.0
    %202 = vmatprep.subr.mxu0 0.0
    %203 = vmatpush2.msra.mxu0 0.0
    %204 = vmatprep.subr.mxu0 0.0
    %205 = vmatpush2.msra.mxu0 0.0
    %206 = vmatprep.subr.mxu0 0.0
    %207 = vmatpush2.msra.mxu0 0.0
    %208 = vmatprep.subr.mxu0 0.0
    %209 = vmatpush2.msra.mxu0 0.0
    %210 = vmatprep.subr.mxu0 0.0
    %211 = vmatpush2.msra.mxu0 0.0
    %212 = vmatprep.subr.mxu0 0.0
    %213 = vmatpush2.msra.mxu0 0.0
    %214 = vmatprep.subr.mxu0 0.0
    %215 = vmatpush2.msra.mxu0 0.0
    %216 = vmatprep.subr.mxu0 0.0
    %217 = vmatpush2.msra.mxu0 0.0
    %218 = vmatprep.subr.mxu0 0.0
    %219 = vmatpush2.msra.mxu0 0.0
    %220 = vmatprep.subr.mxu0 0.0
    %221 = vmatpush2.msra.mxu0 0.0
    %222 = vmatprep.subr.mxu0 0.0
    %223 = vmatpush2.msra.mxu0 0.0
    %224 = vmatprep.mubr.f32.mxu0 0.0
    %225 = vmatmul.mubr.f32.gmra.mxu0 %v158
    %v226 = vpop.f32.mrf.mxu0
    %v227 = vadd.f32 %v154, %v226
    %v228 = vpop.f32.mrf.mxu0
    %229 = vdwg.mxu0
    %vm230 = vcmask 80896
    %231 = vst.msk [vmem:[#allocation8] sm:$0xff] %vm230, %v227
    // Predicated region
    $region34: #{forward.1} parent=1 // pred_check
      _
    $region35: #{forward.1} parent=1 // pred_check_branch
      %233 = sbr.rel (0) target = $region37
    $region36: #{forward.1} parent=1 // pred_region
      %s235 = ssub.s32 128, 128
      %236 = vsyncadd [#allocation4], %s235
      %s238 = sshll.u32 [#allocation8], 4
      %s239 = int_to_ptr.vmem [resolvable:$true] %s238
      %241 = dma.vmem_to_hbm [thread:$0]  %s239, 128, %s5, [#allocation4]
    $region37: #{forward.1} parent=1 // pred_fallthru
      _
    // Predicated region
    $region38: #{forward.1} parent=1 // pred_check
      _
    $region39: #{forward.1} parent=1 // pred_check_branch
      %243 = sbr.rel (0) target = $region41
    $region40: #{forward.1} parent=1 // pred_region
      %244 = dma.done [#allocation4], 128
    $region41: #{forward.1} parent=1 // pred_fallthru
      _
    %245 = vsyncpa [#allocation3], 1
    %246 = vsyncpa [#allocation6], 1
    %247 = vsyncpa [#allocation4], 1

</llo_original>
